<compile_context>
chip_gen: v5e
topology: v5e:2x2
jax: 0.10.0
libtpu: 0.0.40
codegen_flags: <defaults>
</compile_context>

<pallas_src>
import functools

import jax
import jax.numpy as jnp
from jax.experimental import pallas as pl
from jax.experimental.pallas import tpu as pltpu


# ----------------------------- activation helpers -----------------------------

def _apply_act(x, act_type):
    if act_type == 'relu':
        return jnp.maximum(x, 0.0)
    elif act_type == 'lrelu':
        return jnp.where(x >= 0, x, 0.1 * x)   # matches nn.LeakyReLU(0.1) in the spec
    elif act_type == 'mish':
        return x * jnp.tanh(jax.nn.softplus(x))
    elif act_type == 'silu':
        return x * jax.nn.sigmoid(x)
    return x


# ------------------------------- Pallas kernel --------------------------------

def _tap_slice(start, size, step):
    if step == 1:
        return pl.ds(start, size)
    # stride > 1 path (not exercised by the demo shapes)
    return pl.ds(start, size, stride=step)


def _conv3d_tap_kernel(x_ref, w_ref, b_ref, o_ref, acc_ref, *,
                       k, s, d, Ho, Wo, act_type):
    """One (batch, out-depth, depth-tap) grid step of a channels-last Conv3d.

    x_ref  : (Hp, Wp, C1)      zero-padded input plane at depth  do*s + kd*d
    w_ref  : (k*k, C1, C2)     weights of this depth tap, all (kh, kw) in-plane taps
    b_ref  : (1, C2)           bias
    o_ref  : (Ho*Wo, C2)       lane-dense output slab for (n, do)
    acc_ref: (Ho*Wo, C2) f32   accumulator scratch, persists across the kd axis
    """
    kd = pl.program_id(2)

    @pl.when(kd == 0)
    def _init():
        acc_ref[...] = jnp.zeros_like(acc_ref)

    m = Ho * Wo
    contrib = None
    for kh in range(k):
        for kw in range(k):
            xs = x_ref[_tap_slice(kh * d, Ho, s), _tap_slice(kw * d, Wo, s), :]
            xm = xs.reshape(m, xs.shape[-1])                       # (Ho*Wo, C1)
            term = jnp.dot(xm, w_ref[kh * k + kw],
                           preferred_element_type=jnp.float32)     # MXU, f32 accum
            contrib = term if contrib is None else contrib + term
    acc_ref[...] += contrib

    @pl.when(kd == k - 1)
    def _finalize():
        y = acc_ref[...] + b_ref[...].astype(jnp.float32)
        y = _apply_act(y, act_type)
        o_ref[...] = y.astype(o_ref.dtype)


def _compiler_params(in_block_bytes, w_block_bytes, out_block_bytes, acc_bytes):
    # double-buffered input / weight / output blocks + accumulator + slack
    need = (2 * in_block_bytes + 2 * w_block_bytes + 2 * out_block_bytes
            + acc_bytes + (2 << 20))
    kwargs = dict(dimension_semantics=("parallel", "parallel", "arbitrary"))
    if need > (24 << 20):
        # Only raise the scoped-VMEM limit when actually needed; stay conservative
        # because v7x has just 64 MiB of physical VMEM.
        kwargs["vmem_limit_bytes"] = int(min(need, 56 << 20))
    return pltpu.CompilerParams(**kwargs)


def _conv3d_single_group(xp, w_taps, bias2d, k, s, d, Do, Ho, Wo, act_type):
    """xp: (N, Dp, Hp, Wp, C1) zero-padded NDHWC input (one channel group).
    w_taps: (k, k*k, C1, C2).  bias2d: (1, C2).  Returns (N, Do, Ho*Wo, C2)."""
    N, Dp, Hp, Wp, C1 = xp.shape
    C2 = w_taps.shape[-1]
    M = Ho * Wo
    itemsize = jnp.dtype(xp.dtype).itemsize

    kernel = functools.partial(_conv3d_tap_kernel, k=k, s=s, d=d,
                               Ho=Ho, Wo=Wo, act_type=act_type)

    return pl.pallas_call(
        kernel,
        out_shape=jax.ShapeDtypeStruct((N, Do, M, C2), xp.dtype),
        grid_spec=pltpu.PrefetchScalarGridSpec(
            num_scalar_prefetch=0,
            grid=(N, Do, k),                                   # depth-tap reduction last
            in_specs=[
                # One padded (Hp, Wp, C1) plane per step, at depth do*s + kd*d.
                pl.BlockSpec((None, None, Hp, Wp, C1),
                             lambda n, do, kd: (n, do * s + kd * d, 0, 0, 0)),
                # Per-depth-tap weight slab holding all k*k in-plane taps.
                pl.BlockSpec((None, k * k, C1, C2),
                             lambda n, do, kd: (kd, 0, 0, 0)),
                pl.BlockSpec((1, C2), lambda n, do, kd: (0, 0)),
            ],
            out_specs=pl.BlockSpec((None, None, M, C2),
                                   lambda n, do, kd: (n, do, 0, 0)),
            scratch_shapes=[pltpu.VMEM((M, C2), jnp.float32)],
        ),
        compiler_params=_compiler_params(
            Hp * Wp * C1 * itemsize,
            k * k * C1 * C2 * itemsize,
            M * C2 * itemsize,
            M * C2 * 4),
    )(xp, w_taps, bias2d)


# ----------------------- conv3d wrapper (channels-last) -----------------------

def conv3d_ndhwc(x, weight, bias, k, p, s, d, g, act_type=''):
    """Conv3d on a channels-last (N, D, H, W, C1) input.
    weight: PyTorch layout (C2, C1//g, k, k, k); bias: (C2,) or None.
    Returns (N, Do, Ho, Wo, C2)."""
    N, D, H, W, C1 = x.shape
    C2 = weight.shape[0]
    C1g, C2g = C1 // g, C2 // g

    def odim(sz):
        return (sz + 2 * p - d * (k - 1) - 1) // s + 1

    Do, Ho, Wo = odim(D), odim(H), odim(W)
    xp = jnp.pad(x, ((0, 0), (p, p), (p, p), (p, p), (0, 0))) if p > 0 else x

    outs = []
    for gi in range(g):
        xg = xp[..., gi * C1g:(gi + 1) * C1g] if g > 1 else xp
        wg = weight[gi * C2g:(gi + 1) * C2g]                       # (C2g, C1g, k, k, k)
        # (kd, kh, kw, C1g, C2g) -> (k, k*k, C1g, C2g): tap-major, channels-last operand.
        wg = jnp.transpose(wg, (2, 3, 4, 1, 0)).reshape(k, k * k, C1g, C2g)
        bg = (bias[gi * C2g:(gi + 1) * C2g] if bias is not None
              else jnp.zeros((C2g,), x.dtype)).reshape(1, C2g)
        outs.append(_conv3d_single_group(xg, wg, bg, k, s, d, Do, Ho, Wo, act_type))
    out = outs[0] if g == 1 else jnp.concatenate(outs, axis=-1)    # (N, Do, Ho*Wo, C2)
    return out.reshape(N, Do, Ho, Wo, C2)                          # free row-major reshape


# ------------------------ Conv3d module (mirrors PyTorch) ------------------------

def _init_conv3d_params(key, c1, c2, k, g, add_bias, dtype=jnp.float32):
    # Matches PyTorch nn.Conv3d default init bounds (kaiming_uniform a=sqrt(5)).
    fan_in = (c1 // g) * k ** 3
    bound = 1.0 / (fan_in ** 0.5)
    kw, kb = jax.random.split(key)
    weight = jax.random.uniform(kw, (c2, c1 // g, k, k, k), dtype, -bound, bound)
    bias = (jax.random.uniform(kb, (c2,), dtype, -bound, bound) if add_bias else None)
    return weight, bias


class Conv3dPallas:
    """Pallas re-implementation of the PyTorch Conv3d wrapper module (forward only)."""

    def __init__(self, c1, c2, k=1, p=0, s=1, d=1, g=1, act_type='', norm_type='',
                 depthwise=False, key=None):
        assert norm_type == '', "TODO(synk): BatchNorm3d / InstanceNorm3d not implemented"
        add_bias = False if norm_type else True
        self.stages = []
        key = key if key is not None else jax.random.PRNGKey(0)
        if depthwise:
            assert c1 == c2, 'In depthwise conv, c1 must equal c2.'
            k1, k2 = jax.random.split(key)
            w1, b1 = _init_conv3d_params(k1, c1, c2, k, c1, add_bias)
            self.stages.append(dict(w=w1, b=b1, k=k, p=p, s=s, d=d, g=c1, act=act_type))
            w2, b2 = _init_conv3d_params(k2, c1, c2, 1, 1, add_bias)
            self.stages.append(dict(w=w2, b=b2, k=1, p=0, s=1, d=d, g=1, act=act_type))
        else:
            w1, b1 = _init_conv3d_params(key, c1, c2, k, g, add_bias)
            self.stages.append(dict(w=w1, b=b1, k=k, p=p, s=s, d=d, g=g, act=act_type))

    def __call__(self, x_ncdhw):
        # Single layout conversion at the module boundary: NCDHW -> NDHWC ... -> NCDHW.
        y = jnp.transpose(x_ncdhw, (0, 2, 3, 4, 1))
        for st in self.stages:
            y = conv3d_ndhwc(y, st['w'], st['b'], st['k'], st['p'], st['s'],
                             st['d'], st['g'], st['act'])
        return jnp.transpose(y, (0, 4, 1, 2, 3))


# ----------------------------------- demo / check -----------------------------------

def _reference(x, stages):
    # Pure-JAX reference using lax.conv_general_dilated (same semantics as PyTorch).
    y = x
    for st in stages:
        y = jax.lax.conv_general_dilated(
            y, st['w'],
            window_strides=(st['s'],) * 3,
            padding=[(st['p'], st['p'])] * 3,
            rhs_dilation=(st['d'],) * 3,
            dimension_numbers=('NCDHW', 'OIDHW', 'NCDHW'),
            feature_group_count=st['g'])
        if st['b'] is not None:
            y = y + st['b'][None, :, None, None, None]
        y = _apply_act(y, st['act'])
    return y


if __name__ == "__main__":
    key = jax.random.PRNGKey(0)
    kx, kp1, kp2 = jax.random.split(key, 3)

    c1, c2 = 4, 8
    x = jax.random.normal(kx, (2, c1, 8, 8, 8), jnp.float32)      # NCDHW

    # Check 1: Conv3d(c1=4, c2=8, k=3, p=1, s=1, act_type='silu')
    m1 = Conv3dPallas(c1, c2, k=3, p=1, s=1, d=1, g=1, act_type='silu', key=kp1)
    y1 = jax.block_until_ready(m1(x))
    y1_ref = _reference(x, m1.stages)
    assert y1.shape == y1_ref.shape == (2, c2, 8, 8, 8), (y1.shape, y1_ref.shape)
    assert jnp.allclose(y1, y1_ref, atol=1e-4, rtol=1e-4), \
        float(jnp.max(jnp.abs(y1 - y1_ref)))

    # Check 2: grouped Conv3d(c1=4, c2=8, k=3, p=1, s=1, g=2, act_type='lrelu')
    m2 = Conv3dPallas(c1, c2, k=3, p=1, s=1, d=1, g=2, act_type='lrelu', key=kp2)
    y2 = jax.block_until_ready(m2(x))
    y2_ref = _reference(x, m2.stages)
    assert y2.shape == y2_ref.shape == (2, c2, 8, 8, 8), (y2.shape, y2_ref.shape)
    assert jnp.allclose(y2, y2_ref, atol=1e-4, rtol=1e-4), \
        float(jnp.max(jnp.abs(y2 - y2_ref)))

    print("KERNEL_OK")
</pallas_src>

<mosaic_0001>
module attributes {stable_mosaic.version = 11 : i64} {
  func.func @_conv3d_tap_kernel(%arg0: i32, %arg1: i32, %arg2: i32, %arg3: memref<1x1x10x10x4xf32, #tpu.memory_space<vmem>>, %arg4: memref<1x9x4x8xf32, #tpu.memory_space<vmem>>, %arg5: memref<1x8xf32, #tpu.memory_space<vmem>>, %arg6: memref<1x1x64x8xf32, #tpu.memory_space<vmem>>, %arg7: memref<64x8xf32, #tpu.memory_space<vmem>>) attributes {dimension_semantics = [#tpu.dimension_semantics<parallel>, #tpu.dimension_semantics<parallel>, #tpu.dimension_semantics<arbitrary>], iteration_bounds = array<i64: 2, 8, 3>, scalar_prefetch = 0 : i64, scratch_operands = 1 : i64, tpu.core_type = #tpu.core_type<tc>, window_params = [{transform_indices = @transform_0, window_bounds = array<i64: 1, 1, 10, 10, 4>}, {transform_indices = @transform_1, window_bounds = array<i64: 1, 9, 4, 8>}, {pipeline_mode = #tpu.pipeline_mode<synchronous>, transform_indices = @transform_2, window_bounds = array<i64: 1, 8>}, {transform_indices = @transform_3, window_bounds = array<i64: 1, 1, 64, 8>}]} {
    %c0_i32 = arith.constant 0 : i32
    %0 = arith.cmpi eq, %arg2, %c0_i32 : i32
    %1 = arith.extui %0 : i1 to i32
    %c0_i32_0 = arith.constant 0 : i32
    %2 = arith.cmpi ne, %1, %c0_i32_0 : i32
    scf.if %2 {
      %cst_86 = arith.constant 0.000000e+00 : f32
      %71 = vector.broadcast %cst_86 : f32 to vector<64x8xf32>
      %c0_87 = arith.constant 0 : index
      %c0_88 = arith.constant 0 : index
      %72 = vector.load %arg7[%c0_87, %c0_88] : memref<64x8xf32, #tpu.memory_space<vmem>>, vector<64x8xf32>
      tpu.vector_store %arg7[%c0_87, %c0_88], %71 {strides = array<i32>} : memref<64x8xf32, #tpu.memory_space<vmem>>, vector<64x8xf32>,
    } else {
    }
    %c0 = arith.constant 0 : index
    %c0_1 = arith.constant 0 : index
    %c0_2 = arith.constant 0 : index
    %c0_3 = arith.constant 0 : index
    %c0_4 = arith.constant 0 : index
    %3 = vector.load %arg3[%c0, %c0_1, %c0_2, %c0_3, %c0_4] : memref<1x1x10x10x4xf32, #tpu.memory_space<vmem>>, vector<1x1x8x8x4xf32>
    %4 = vector.shape_cast %3 : vector<1x1x8x8x4xf32> to vector<8x8x4xf32>
    %5 = vector.shape_cast %4 : vector<8x8x4xf32> to vector<64x4xf32>
    %c0_5 = arith.constant 0 : index
    %c0_6 = arith.constant 0 : index
    %c0_7 = arith.constant 0 : index
    %c0_8 = arith.constant 0 : index
    %6 = vector.load %arg4[%c0_5, %c0_6, %c0_7, %c0_8] : memref<1x9x4x8xf32, #tpu.memory_space<vmem>>, vector<1x1x4x8xf32>
    %7 = vector.shape_cast %6 : vector<1x1x4x8xf32> to vector<4x8xf32>
    %cst = arith.constant dense<0.000000e+00> : vector<64x8xf32>
    %8 = tpu.matmul %5, %7, %cst {dimension_numbers = #tpu.dot_dimension_numbers<[1], [0], [0], [1], [0, 0, 1, 1], [], []>} : vector<64x4xf32>, vector<4x8xf32>, vector<64x8xf32> -> vector<64x8xf32>
    %c0_9 = arith.constant 0 : index
    %c0_10 = arith.constant 0 : index
    %c0_11 = arith.constant 0 : index
    %c1 = arith.constant 1 : index
    %c0_12 = arith.constant 0 : index
    %9 = vector.load %arg3[%c0_9, %c0_10, %c0_11, %c1, %c0_12] : memref<1x1x10x10x4xf32, #tpu.memory_space<vmem>>, vector<1x1x8x8x4xf32>
    %10 = vector.shape_cast %9 : vector<1x1x8x8x4xf32> to vector<8x8x4xf32>
    %11 = vector.shape_cast %10 : vector<8x8x4xf32> to vector<64x4xf32>
    %c0_13 = arith.constant 0 : index
    %c1_14 = arith.constant 1 : index
    %c0_15 = arith.constant 0 : index
    %c0_16 = arith.constant 0 : index
    %12 = vector.load %arg4[%c0_13, %c1_14, %c0_15, %c0_16] : memref<1x9x4x8xf32, #tpu.memory_space<vmem>>, vector<1x1x4x8xf32>
    %13 = vector.shape_cast %12 : vector<1x1x4x8xf32> to vector<4x8xf32>
    %cst_17 = arith.constant dense<0.000000e+00> : vector<64x8xf32>
    %14 = tpu.matmul %11, %13, %cst_17 {dimension_numbers = #tpu.dot_dimension_numbers<[1], [0], [0], [1], [0, 0, 1, 1], [], []>} : vector<64x4xf32>, vector<4x8xf32>, vector<64x8xf32> -> vector<64x8xf32>
    %15 = arith.addf %8, %14 : vector<64x8xf32>
    %c0_18 = arith.constant 0 : index
    %c0_19 = arith.constant 0 : index
    %c0_20 = arith.constant 0 : index
    %c2 = arith.constant 2 : index
    %c0_21 = arith.constant 0 : index
    %16 = vector.load %arg3[%c0_18, %c0_19, %c0_20, %c2, %c0_21] : memref<1x1x10x10x4xf32, #tpu.memory_space<vmem>>, vector<1x1x8x8x4xf32>
    %17 = vector.shape_cast %16 : vector<1x1x8x8x4xf32> to vector<8x8x4xf32>
    %18 = vector.shape_cast %17 : vector<8x8x4xf32> to vector<64x4xf32>
    %c0_22 = arith.constant 0 : index
    %c2_23 = arith.constant 2 : index
    %c0_24 = arith.constant 0 : index
    %c0_25 = arith.constant 0 : index
    %19 = vector.load %arg4[%c0_22, %c2_23, %c0_24, %c0_25] : memref<1x9x4x8xf32, #tpu.memory_space<vmem>>, vector<1x1x4x8xf32>
    %20 = vector.shape_cast %19 : vector<1x1x4x8xf32> to vector<4x8xf32>
    %cst_26 = arith.constant dense<0.000000e+00> : vector<64x8xf32>
    %21 = tpu.matmul %18, %20, %cst_26 {dimension_numbers = #tpu.dot_dimension_numbers<[1], [0], [0], [1], [0, 0, 1, 1], [], []>} : vector<64x4xf32>, vector<4x8xf32>, vector<64x8xf32> -> vector<64x8xf32>
    %22 = arith.addf %15, %21 : vector<64x8xf32>
    %c0_27 = arith.constant 0 : index
    %c0_28 = arith.constant 0 : index
    %c1_29 = arith.constant 1 : index
    %c0_30 = arith.constant 0 : index
    %c0_31 = arith.constant 0 : index
    %23 = vector.load %arg3[%c0_27, %c0_28, %c1_29, %c0_30, %c0_31] : memref<1x1x10x10x4xf32, #tpu.memory_space<vmem>>, vector<1x1x8x8x4xf32>
    %24 = vector.shape_cast %23 : vector<1x1x8x8x4xf32> to vector<8x8x4xf32>
    %25 = vector.shape_cast %24 : vector<8x8x4xf32> to vector<64x4xf32>
    %c0_32 = arith.constant 0 : index
    %c3 = arith.constant 3 : index
    %c0_33 = arith.constant 0 : index
    %c0_34 = arith.constant 0 : index
    %26 = vector.load %arg4[%c0_32, %c3, %c0_33, %c0_34] : memref<1x9x4x8xf32, #tpu.memory_space<vmem>>, vector<1x1x4x8xf32>
    %27 = vector.shape_cast %26 : vector<1x1x4x8xf32> to vector<4x8xf32>
    %cst_35 = arith.constant dense<0.000000e+00> : vector<64x8xf32>
    %28 = tpu.matmul %25, %27, %cst_35 {dimension_numbers = #tpu.dot_dimension_numbers<[1], [0], [0], [1], [0, 0, 1, 1], [], []>} : vector<64x4xf32>, vector<4x8xf32>, vector<64x8xf32> -> vector<64x8xf32>
    %29 = arith.addf %22, %28 : vector<64x8xf32>
    %c0_36 = arith.constant 0 : index
    %c0_37 = arith.constant 0 : index
    %c1_38 = arith.constant 1 : index
    %c1_39 = arith.constant 1 : index
    %c0_40 = arith.constant 0 : index
    %30 = vector.load %arg3[%c0_36, %c0_37, %c1_38, %c1_39, %c0_40] : memref<1x1x10x10x4xf32, #tpu.memory_space<vmem>>, vector<1x1x8x8x4xf32>
    %31 = vector.shape_cast %30 : vector<1x1x8x8x4xf32> to vector<8x8x4xf32>
    %32 = vector.shape_cast %31 : vector<8x8x4xf32> to vector<64x4xf32>
    %c0_41 = arith.constant 0 : index
    %c4 = arith.constant 4 : index
    %c0_42 = arith.constant 0 : index
    %c0_43 = arith.constant 0 : index
    %33 = vector.load %arg4[%c0_41, %c4, %c0_42, %c0_43] : memref<1x9x4x8xf32, #tpu.memory_space<vmem>>, vector<1x1x4x8xf32>
    %34 = vector.shape_cast %33 : vector<1x1x4x8xf32> to vector<4x8xf32>
    %cst_44 = arith.constant dense<0.000000e+00> : vector<64x8xf32>
    %35 = tpu.matmul %32, %34, %cst_44 {dimension_numbers = #tpu.dot_dimension_numbers<[1], [0], [0], [1], [0, 0, 1, 1], [], []>} : vector<64x4xf32>, vector<4x8xf32>, vector<64x8xf32> -> vector<64x8xf32>
    %36 = arith.addf %29, %35 : vector<64x8xf32>
    %c0_45 = arith.constant 0 : index
    %c0_46 = arith.constant 0 : index
    %c1_47 = arith.constant 1 : index
    %c2_48 = arith.constant 2 : index
    %c0_49 = arith.constant 0 : index
    %37 = vector.load %arg3[%c0_45, %c0_46, %c1_47, %c2_48, %c0_49] : memref<1x1x10x10x4xf32, #tpu.memory_space<vmem>>, vector<1x1x8x8x4xf32>
    %38 = vector.shape_cast %37 : vector<1x1x8x8x4xf32> to vector<8x8x4xf32>
    %39 = vector.shape_cast %38 : vector<8x8x4xf32> to vector<64x4xf32>
    %c0_50 = arith.constant 0 : index
    %c5 = arith.constant 5 : index
    %c0_51 = arith.constant 0 : index
    %c0_52 = arith.constant 0 : index
    %40 = vector.load %arg4[%c0_50, %c5, %c0_51, %c0_52] : memref<1x9x4x8xf32, #tpu.memory_space<vmem>>, vector<1x1x4x8xf32>
    %41 = vector.shape_cast %40 : vector<1x1x4x8xf32> to vector<4x8xf32>
    %cst_53 = arith.constant dense<0.000000e+00> : vector<64x8xf32>
    %42 = tpu.matmul %39, %41, %cst_53 {dimension_numbers = #tpu.dot_dimension_numbers<[1], [0], [0], [1], [0, 0, 1, 1], [], []>} : vector<64x4xf32>, vector<4x8xf32>, vector<64x8xf32> -> vector<64x8xf32>
    %43 = arith.addf %36, %42 : vector<64x8xf32>
    %c0_54 = arith.constant 0 : index
    %c0_55 = arith.constant 0 : index
    %c2_56 = arith.constant 2 : index
    %c0_57 = arith.constant 0 : index
    %c0_58 = arith.constant 0 : index
    %44 = vector.load %arg3[%c0_54, %c0_55, %c2_56, %c0_57, %c0_58] : memref<1x1x10x10x4xf32, #tpu.memory_space<vmem>>, vector<1x1x8x8x4xf32>
    %45 = vector.shape_cast %44 : vector<1x1x8x8x4xf32> to vector<8x8x4xf32>
    %46 = vector.shape_cast %45 : vector<8x8x4xf32> to vector<64x4xf32>
    %c0_59 = arith.constant 0 : index
    %c6 = arith.constant 6 : index
    %c0_60 = arith.constant 0 : index
    %c0_61 = arith.constant 0 : index
    %47 = vector.load %arg4[%c0_59, %c6, %c0_60, %c0_61] : memref<1x9x4x8xf32, #tpu.memory_space<vmem>>, vector<1x1x4x8xf32>
    %48 = vector.shape_cast %47 : vector<1x1x4x8xf32> to vector<4x8xf32>
    %cst_62 = arith.constant dense<0.000000e+00> : vector<64x8xf32>
    %49 = tpu.matmul %46, %48, %cst_62 {dimension_numbers = #tpu.dot_dimension_numbers<[1], [0], [0], [1], [0, 0, 1, 1], [], []>} : vector<64x4xf32>, vector<4x8xf32>, vector<64x8xf32> -> vector<64x8xf32>
    %50 = arith.addf %43, %49 : vector<64x8xf32>
    %c0_63 = arith.constant 0 : index
    %c0_64 = arith.constant 0 : index
    %c2_65 = arith.constant 2 : index
    %c1_66 = arith.constant 1 : index
    %c0_67 = arith.constant 0 : index
    %51 = vector.load %arg3[%c0_63, %c0_64, %c2_65, %c1_66, %c0_67] : memref<1x1x10x10x4xf32, #tpu.memory_space<vmem>>, vector<1x1x8x8x4xf32>
    %52 = vector.shape_cast %51 : vector<1x1x8x8x4xf32> to vector<8x8x4xf32>
    %53 = vector.shape_cast %52 : vector<8x8x4xf32> to vector<64x4xf32>
    %c0_68 = arith.constant 0 : index
    %c7 = arith.constant 7 : index
    %c0_69 = arith.constant 0 : index
    %c0_70 = arith.constant 0 : index
    %54 = vector.load %arg4[%c0_68, %c7, %c0_69, %c0_70] : memref<1x9x4x8xf32, #tpu.memory_space<vmem>>, vector<1x1x4x8xf32>
    %55 = vector.shape_cast %54 : vector<1x1x4x8xf32> to vector<4x8xf32>
    %cst_71 = arith.constant dense<0.000000e+00> : vector<64x8xf32>
    %56 = tpu.matmul %53, %55, %cst_71 {dimension_numbers = #tpu.dot_dimension_numbers<[1], [0], [0], [1], [0, 0, 1, 1], [], []>} : vector<64x4xf32>, vector<4x8xf32>, vector<64x8xf32> -> vector<64x8xf32>
    %57 = arith.addf %50, %56 : vector<64x8xf32>
    %c0_72 = arith.constant 0 : index
    %c0_73 = arith.constant 0 : index
    %c2_74 = arith.constant 2 : index
    %c2_75 = arith.constant 2 : index
    %c0_76 = arith.constant 0 : index
    %58 = vector.load %arg3[%c0_72, %c0_73, %c2_74, %c2_75, %c0_76] : memref<1x1x10x10x4xf32, #tpu.memory_space<vmem>>, vector<1x1x8x8x4xf32>
    %59 = vector.shape_cast %58 : vector<1x1x8x8x4xf32> to vector<8x8x4xf32>
    %60 = vector.shape_cast %59 : vector<8x8x4xf32> to vector<64x4xf32>
    %c0_77 = arith.constant 0 : index
    %c8 = arith.constant 8 : index
    %c0_78 = arith.constant 0 : index
    %c0_79 = arith.constant 0 : index
    %61 = vector.load %arg4[%c0_77, %c8, %c0_78, %c0_79] : memref<1x9x4x8xf32, #tpu.memory_space<vmem>>, vector<1x1x4x8xf32>
    %62 = vector.shape_cast %61 : vector<1x1x4x8xf32> to vector<4x8xf32>
    %cst_80 = arith.constant dense<0.000000e+00> : vector<64x8xf32>
    %63 = tpu.matmul %60, %62, %cst_80 {dimension_numbers = #tpu.dot_dimension_numbers<[1], [0], [0], [1], [0, 0, 1, 1], [], []>} : vector<64x4xf32>, vector<4x8xf32>, vector<64x8xf32> -> vector<64x8xf32>
    %64 = arith.addf %57, %63 : vector<64x8xf32>
    %c0_81 = arith.constant 0 : index
    %c0_82 = arith.constant 0 : index
    %65 = vector.load %arg7[%c0_81, %c0_82] : memref<64x8xf32, #tpu.memory_space<vmem>>, vector<64x8xf32>
    %66 = arith.addf %65, %64 : vector<64x8xf32>
    %c0_83 = arith.constant 0 : index
    %c0_84 = arith.constant 0 : index
    %67 = vector.load %arg7[%c0_83, %c0_84] : memref<64x8xf32, #tpu.memory_space<vmem>>, vector<64x8xf32>
    tpu.vector_store %arg7[%c0_83, %c0_84], %66 {strides = array<i32>} : memref<64x8xf32, #tpu.memory_space<vmem>>, vector<64x8xf32>,
    %c2_i32 = arith.constant 2 : i32
    %68 = arith.cmpi eq, %arg2, %c2_i32 : i32
    %69 = arith.extui %68 : i1 to i32
    %c0_i32_85 = arith.constant 0 : i32
    %70 = arith.cmpi ne, %69, %c0_i32_85 : i32
    scf.if %70 {
      %c0_86 = arith.constant 0 : index
      %c0_87 = arith.constant 0 : index
      %71 = vector.load %arg7[%c0_86, %c0_87] : memref<64x8xf32, #tpu.memory_space<vmem>>, vector<64x8xf32>
      %c0_88 = arith.constant 0 : index
      %c0_89 = arith.constant 0 : index
      %72 = vector.load %arg5[%c0_88, %c0_89] : memref<1x8xf32, #tpu.memory_space<vmem>>, vector<1x8xf32>
      %73 = vector.broadcast %72 : vector<1x8xf32> to vector<64x8xf32>
      %74 = arith.addf %71, %73 : vector<64x8xf32>
      %75 = arith.negf %74 : vector<64x8xf32>
      %76 = math.exp %75 : vector<64x8xf32>
      %cst_90 = arith.constant 1.000000e+00 : f32
      %77 = vector.broadcast %cst_90 : f32 to vector<64x8xf32>
      %78 = arith.addf %77, %76 : vector<64x8xf32>
      %79 = arith.divf %77, %78 : vector<64x8xf32>
      %80 = arith.mulf %74, %79 : vector<64x8xf32>
      %c0_91 = arith.constant 0 : index
      %c0_92 = arith.constant 0 : index
      %c0_93 = arith.constant 0 : index
      %c0_94 = arith.constant 0 : index
      %81 = vector.load %arg6[%c0_91, %c0_92, %c0_93, %c0_94] : memref<1x1x64x8xf32, #tpu.memory_space<vmem>>, vector<1x1x64x8xf32>
      %82 = vector.shape_cast %81 : vector<1x1x64x8xf32> to vector<64x8xf32>
      %83 = vector.shape_cast %80 : vector<64x8xf32> to vector<1x1x64x8xf32>
      tpu.vector_store %arg6[%c0_91, %c0_92, %c0_93, %c0_94], %83 {strides = array<i32>} : memref<1x1x64x8xf32, #tpu.memory_space<vmem>>, vector<1x1x64x8xf32>,
    } else {
    }
    return
  }
  func.func @transform_0(%arg0: i32, %arg1: i32, %arg2: i32) -> (i32, i32, i32, i32, i32) {
    %c1_i32 = arith.constant 1 : i32
    %0 = arith.muli %arg1, %c1_i32 : i32
    %c1_i32_0 = arith.constant 1 : i32
    %1 = arith.muli %arg2, %c1_i32_0 : i32
    %2 = arith.addi %0, %1 : i32
    %c0_i32 = arith.constant 0 : i32
    %c0_i32_1 = arith.constant 0 : i32
    %c0_i32_2 = arith.constant 0 : i32
    %c0_i32_3 = arith.constant 0 : i32
    return %arg0, %2, %c0_i32, %c0_i32_1, %c0_i32_2 : i32, i32, i32, i32, i32
  }
  func.func @transform_1(%arg0: i32, %arg1: i32, %arg2: i32) -> (i32, i32, i32, i32) {
    %c0_i32 = arith.constant 0 : i32
    %c0_i32_0 = arith.constant 0 : i32
    %c0_i32_1 = arith.constant 0 : i32
    %c0_i32_2 = arith.constant 0 : i32
    return %arg2, %c0_i32, %c0_i32_0, %c0_i32_1 : i32, i32, i32, i32
  }
  func.func @transform_2(%arg0: i32, %arg1: i32, %arg2: i32) -> (i32, i32) {
    %c0_i32 = arith.constant 0 : i32
    %c0_i32_0 = arith.constant 0 : i32
    %c0_i32_1 = arith.constant 0 : i32
    return %c0_i32, %c0_i32_0 : i32, i32
  }
  func.func @transform_3(%arg0: i32, %arg1: i32, %arg2: i32) -> (i32, i32, i32, i32) {
    %c0_i32 = arith.constant 0 : i32
    %c0_i32_0 = arith.constant 0 : i32
    %c0_i32_1 = arith.constant 0 : i32
    return %arg0, %arg1, %c0_i32, %c0_i32_0 : i32, i32, i32, i32
  }
}

</mosaic_0001>

<llo_original>
// kernel: tpu_custom_call.1
$region0: #{tpu_custom_call.1}
  #allocation0 [shape = 'u32[]', space=smem, size = 0x4, offset = 0x4, fixed_abs, tag = 'smem constant byte address 0x4 - core index']
  #allocation1 [shape = 'u32[72,128]{1,0:T(1,128)}', space=vmem, size = 0x9000, scoped, tag = 'internal scratch']
  #allocation2 [shape = 'f32[64,8]{1,0:T(8,128)}', space=vmem, size = 0x8000, scoped, tag = 'scratch operand']
  %s0 = inlined_call_operand.vmem [shape: f32[2,10,10,10,4], index: 0, kind: input, shape index: {}]
  %s1 = inlined_call_operand.vmem [shape: f32[3,9,4,8], index: 1, kind: input, shape index: {}]
  %s2 = inlined_call_operand.vmem [shape: f32[1,8], index: 2, kind: input, shape index: {}]
  %s3 = inlined_call_operand.vmem [shape: f32[2,8,64,8], index: 3, kind: output, shape index: {}]
  %s4 = sld [smem:[#allocation0]]
  $region53: #{tpu_custom_call.1} parent=0
    _
  %s6 = ssub.s32 1, %s4
  %s7 = scalar_select 0, %s6, %s4
  loop: start=0, step=1, limit=50
  $region2: #{tpu_custom_call.1} parent=0 // loop_pre_header
    _
  $region3: #{tpu_custom_call.1} parent=0 // loop_header
    %s9 = sphi 0, %s13
    %p10 = scmp.ge.s32.totalorder %s9, 50
    %s16 = sphi 0, %s35
    %s17 = sphi 0, %s31
    %s18 = sphi 0, %s27
    %s19 = sphi 0, %s16
    %s20 = sphi 0, %s17
    %s21 = sphi 0, %s18
    %s22 = sphi 0, %s19
    %s23 = sphi 0, %s20
    %s24 = sphi 0, %s21
    %s42 = sphi 0, %s44
    %s45 = sphi 0, %s42
    %s46 = sphi 0, %s45
    %s62 = sphi 0, %s46
    %s68 = sphi 0, %s70
    %s71 = sphi 0, %s68
    %s72 = sphi 0, %s71
    %s88 = sphi 0, %s72
    %s92 = sphi 0, %s92
    %s94 = sphi 0, %s92
    %s95 = sphi 0, %s94
    %s109 = sphi 0, %s95
    %s117 = sphi 0, %s119
    %s120 = sphi 0, %s117
    %s121 = sphi 0, %s120
    %s137 = sphi 0, %s121
  $region4: #{tpu_custom_call.1} parent=0 // loop_header_branch
    %12 = sbr.rel (%p10) target = $region8
  $region5: #{tpu_custom_call.1} parent=0 // loop_body
    %s14 = ssub.s32 %s9, 1
    %s15 = ssub.s32 %s9, 2
    %s25 = sadd.s32 1, %s18
    %p26 = scmp.ge.s32.totalorder %s25, 3
    %s27 = scalar_select %p26, 0, %s25
    %s28 = sadd.s32 1, %s17
    %s29 = scalar_select %p26, %s28, %s17
    %p30 = scmp.ge.s32.totalorder %s29, 8
    %s31 = scalar_select %p30, 0, %s29
    %s32 = sadd.s32 1, %s16
    %s33 = scalar_select %p30, %s32, %s16
    %p34 = scmp.ge.s32.totalorder %s33, 2
    %s35 = scalar_select %p34, 0, %s33
    %s36 = sadd.s32 %s17, %s18
    %s37 = sadd.s32 %s31, %s27
    %s38 = ssub.s32 %s16, %s35
    %s39 = ssub.s32 %s36, %s37
    %s40 = sor.u32 %s38, %s39
    %p41 = scmp.eq.s32.totalorder %s40, 0
    %s43 = sadd.s32 %s42, 1
    %s44 = scalar_select %p41, %s42, %s43
    %p47 = pneg %p41
    %p48 = scmp.eq.s32.totalorder %s9, 47
    %p49 = por %p47, %p48
    %p50 = scmp.ne.s32.totalorder %s42, %s45
    %p51 = scmp.eq.s32.totalorder %s9, 0
    %p52 = por %p50, %p51
    %p53 = scmp.ne.s32.totalorder %s42, %s45
    %p54 = scmp.eq.s32.totalorder %s14, 47
    %p55 = por %p53, %p54
    %p56 = scmp.ne.s32.totalorder %s45, %s46
    %p57 = scmp.eq.s32.totalorder %s14, 0
    %p58 = por %p56, %p57
    %p59 = scmp.ne.s32.totalorder %s45, %s46
    %p60 = scmp.eq.s32.totalorder %s15, 47
    %p61 = por %p59, %p60
    %p63 = scmp.ne.s32.totalorder %s46, %s62
    %p64 = scmp.eq.s32.totalorder %s15, 0
    %p65 = por %p63, %p64
    %s66 = ssub.s32 %s18, %s27
    %p67 = scmp.eq.s32.totalorder %s66, 0
    %s69 = sadd.s32 %s68, 1
    %s70 = scalar_select %p67, %s68, %s69
    %p73 = pneg %p67
    %p74 = scmp.eq.s32.totalorder %s9, 47
    %p75 = por %p73, %p74
    %p76 = scmp.ne.s32.totalorder %s68, %s71
    %p77 = scmp.eq.s32.totalorder %s9, 0
    %p78 = por %p76, %p77
    %p79 = scmp.ne.s32.totalorder %s68, %s71
    %p80 = scmp.eq.s32.totalorder %s14, 47
    %p81 = por %p79, %p80
    %p82 = scmp.ne.s32.totalorder %s71, %s72
    %p83 = scmp.eq.s32.totalorder %s14, 0
    %p84 = por %p82, %p83
    %p85 = scmp.ne.s32.totalorder %s71, %s72
    %p86 = scmp.eq.s32.totalorder %s15, 47
    %p87 = por %p85, %p86
    %p89 = scmp.ne.s32.totalorder %s72, %s88
    %p90 = scmp.eq.s32.totalorder %s15, 0
    %p91 = por %p89, %p90
    %s93 = sadd.s32 %s92, 1
    %p96 = scmp.eq.s32.totalorder %s9, 47
    %p97 = scmp.ne.s32.totalorder %s92, %s94
    %p98 = scmp.eq.s32.totalorder %s9, 0
    %p99 = por %p97, %p98
    %p100 = scmp.ne.s32.totalorder %s92, %s94
    %p101 = scmp.eq.s32.totalorder %s14, 47
    %p102 = por %p100, %p101
    %p103 = scmp.ne.s32.totalorder %s94, %s95
    %p104 = scmp.eq.s32.totalorder %s14, 0
    %p105 = por %p103, %p104
    %p106 = scmp.ne.s32.totalorder %s94, %s95
    %p107 = scmp.eq.s32.totalorder %s15, 47
    %p108 = por %p106, %p107
    %p110 = scmp.ne.s32.totalorder %s95, %s109
    %p111 = scmp.eq.s32.totalorder %s15, 0
    %p112 = por %p110, %p111
    %s113 = ssub.s32 %s16, %s35
    %s114 = ssub.s32 %s17, %s31
    %s115 = sor.u32 %s113, %s114
    %p116 = scmp.eq.s32.totalorder %s115, 0
    %s118 = sadd.s32 %s117, 1
    %s119 = scalar_select %p116, %s117, %s118
    %p122 = pneg %p116
    %p123 = scmp.eq.s32.totalorder %s9, 47
    %p124 = por %p122, %p123
    %p125 = scmp.ne.s32.totalorder %s117, %s120
    %p126 = scmp.eq.s32.totalorder %s9, 0
    %p127 = por %p125, %p126
    %p128 = scmp.ne.s32.totalorder %s117, %s120
    %p129 = scmp.eq.s32.totalorder %s14, 47
    %p130 = por %p128, %p129
    %p131 = scmp.ne.s32.totalorder %s120, %s121
    %p132 = scmp.eq.s32.totalorder %s14, 0
    %p133 = por %p131, %p132
    %p134 = scmp.ne.s32.totalorder %s120, %s121
    %p135 = scmp.eq.s32.totalorder %s15, 47
    %p136 = por %p134, %p135
    %p138 = scmp.ne.s32.totalorder %s121, %s137
    %p139 = scmp.eq.s32.totalorder %s15, 0
    %p140 = por %p138, %p139
    %p141 = scmp.le.s32.totalorder 1, %s9
    %p142 = scmp.lt.s32.totalorder %s9, 49
    %p143 = pnand %p141, %p142
    %p144 = pneg %p143
    // Predicated region
    $region9: #{tpu_custom_call.1} parent=5 // pred_check
      _
    $region10: #{tpu_custom_call.1} parent=5 // pred_check_branch
      %146 = sbr.rel (%p143) target = $region12
    $region11: #{tpu_custom_call.1} parent=5 // pred_region
      %s147 = ssub.s32 %s9, 1
      // Predicated region
      $region13: #{tpu_custom_call.1} parent=11 // pred_check
        %p148 = pneg %p105
      $region14: #{tpu_custom_call.1} parent=11 // pred_check_branch
        %150 = sbr.rel (%p148) target = $region16
      $region15: #{tpu_custom_call.1} parent=11 // pred_region
        _
      $region16: #{tpu_custom_call.1} parent=11 // pred_fallthru
        _
    $region12: #{tpu_custom_call.1} parent=5 // pred_fallthru
      _
    %p151 = scmp.lt.s32.totalorder %s9, 48
    // Predicated region
    $region17: #{tpu_custom_call.1} parent=5 // pred_check
      %p152 = pneg %p151
    $region18: #{tpu_custom_call.1} parent=5 // pred_check_branch
      %154 = sbr.rel (%p152) target = $region20
    $region19: #{tpu_custom_call.1} parent=5 // pred_region
      // Predicated region
      $region21: #{tpu_custom_call.1} parent=19 // pred_check
        %p155 = pneg %p52
      $region22: #{tpu_custom_call.1} parent=19 // pred_check_branch
        %157 = sbr.rel (%p155) target = $region24
      $region23: #{tpu_custom_call.1} parent=19 // pred_region
        %s158 = sadd.s32 %s17, %s18
        %p159 = scmp.lt.s32.totalorder %s16, 1
        %s160 = scalar_select %p159, %s16, 1
        %p161 = scmp.lt.s32.totalorder %s158, 9
        %s162 = scalar_select %p161, %s158, 9
        %s163 = smul.addr %s162, 20
        %s164 = smul.addr %s160, 200
        %s165 = sadd.s32 %s163, %s164
        %s166 = smul.addr %s165, 8
        %s167 = scalar_lea.vmem %s0, %s166
        %s168 = sadd.s32 %s17, %s18
      $region24: #{tpu_custom_call.1} parent=19 // pred_fallthru
        _
      // Predicated region
      $region25: #{tpu_custom_call.1} parent=19 // pred_check
        %p169 = pneg %p78
      $region26: #{tpu_custom_call.1} parent=19 // pred_check_branch
        %171 = sbr.rel (%p169) target = $region28
      $region27: #{tpu_custom_call.1} parent=19 // pred_region
        %p172 = scmp.lt.s32.totalorder %s18, 2
        %s173 = scalar_select %p172, %s18, 2
        %s174 = smul.addr %s173, 9
        %s175 = smul.addr %s174, 4
        %s176 = scalar_lea.vmem %s1, %s175
      $region28: #{tpu_custom_call.1} parent=19 // pred_fallthru
        _
    $region20: #{tpu_custom_call.1} parent=5 // pred_fallthru
      _
    %p177 = scmp.le.s32.totalorder 1, %s9
    %p178 = scmp.lt.s32.totalorder %s9, 49
    %p179 = pnand %p177, %p178
    %p180 = pneg %p179
    // Predicated region
    $region29: #{tpu_custom_call.1} parent=5 // pred_check
      _
    $region30: #{tpu_custom_call.1} parent=5 // pred_check_branch
      %182 = sbr.rel (%p179) target = $region32
    $region31: #{tpu_custom_call.1} parent=5 // pred_region
      %s183 = ssub.s32 %s9, 1
      %s184 = sadd.s32 %s20, %s21
      %p185 = scmp.lt.s32.totalorder %s19, 1
      %s186 = scalar_select %p185, %s19, 1
      %p187 = scmp.lt.s32.totalorder %s184, 9
      %s188 = scalar_select %p187, %s184, 9
      %s189 = smul.addr %s188, 20
      %s190 = smul.addr %s186, 200
      %s191 = sadd.s32 %s189, %s190
      %s192 = smul.addr %s191, 8
      %s193 = scalar_lea.vmem %s0, %s192
      %p194 = pneg %p58
      %p195 = pneg %p55
      %p196 = scmp.lt.s32.totalorder %s21, 2
      %s197 = scalar_select %p196, %s21, 2
      %s198 = smul.addr %s197, 9
      %s199 = smul.addr %s198, 4
      %s200 = scalar_lea.vmem %s1, %s199
      %p201 = pneg %p84
      %p202 = pneg %p81
      %p203 = pneg %p105
      %p204 = pneg %p102
      %p205 = pneg %p133
      %p206 = pneg %p130
      %p207 = scmp.lt.s32.totalorder %s19, 1
      %s208 = scalar_select %p207, %s19, 1
      %p209 = scmp.lt.s32.totalorder %s20, 7
      %s210 = scalar_select %p209, %s20, 7
      %s211 = smul.addr %s210, 8
      %s212 = smul.addr %s208, 64
      %s213 = sadd.s32 %s211, %s212
      %s214 = smul.addr %s213, 8
      %s215 = scalar_lea.vmem %s3, %s214
      %s216 = sadd.s32 %s20, %s21
      %p217 = scmp.lt.s32.totalorder %s19, 1
      %s218 = scalar_select %p217, %s19, 1
      %p219 = scmp.lt.s32.totalorder %s216, 9
      %s220 = scalar_select %p219, %s216, 9
      %s221 = smul.addr %s220, 20
      %s222 = smul.addr %s218, 200
      %s223 = sadd.s32 %s221, %s222
      %s224 = smul.addr %s223, 8
      %s225 = scalar_lea.vmem %s0, %s224
      %s226 = sadd.s32 %s20, %s21
      %p227 = scmp.lt.s32.totalorder %s21, 2
      %s228 = scalar_select %p227, %s21, 2
      %s229 = smul.addr %s228, 9
      %s230 = smul.addr %s229, 4
      %s231 = scalar_lea.vmem %s1, %s230
      %p232 = scmp.lt.s32.totalorder %s19, 1
      %s233 = scalar_select %p232, %s19, 1
      %p234 = scmp.lt.s32.totalorder %s20, 7
      %s235 = scalar_select %p234, %s20, 7
      %s236 = smul.addr %s235, 8
      %s237 = smul.addr %s233, 64
      %s238 = sadd.s32 %s236, %s237
      %s239 = smul.addr %s238, 8
      %s240 = scalar_lea.vmem %s3, %s239
      %p241 = scmp.eq.s32.totalorder %s21, 0
      // Predicated region
      $region33: #{tpu_custom_call.1} parent=31 // pred_check
        %p242 = pneg %p241
      $region34: #{tpu_custom_call.1} parent=31 // pred_check_branch
        %244 = sbr.rel (%p242) target = $region36
      $region35: #{tpu_custom_call.1} parent=31 // pred_region
        %vm245 = vcmask 64512
        %246 = vst.msk [vmem:[#allocation2] sm:$0xff] %vm245, 0.0
        %247 = vst.msk [vmem:[#allocation2 + $0x8] sm:$0xff] %vm245, 0.0
        %248 = vst.msk [vmem:[#allocation2 + $0x10] sm:$0xff] %vm245, 0.0
        %249 = vst.msk [vmem:[#allocation2 + $0x18] sm:$0xff] %vm245, 0.0
        %250 = vst.msk [vmem:[#allocation2 + $0x20] sm:$0xff] %vm245, 0.0
        %251 = vst.msk [vmem:[#allocation2 + $0x28] sm:$0xff] %vm245, 0.0
        %252 = vst.msk [vmem:[#allocation2 + $0x30] sm:$0xff] %vm245, 0.0
        %253 = vst.msk [vmem:[#allocation2 + $0x38] sm:$0xff] %vm245, 0.0
      $region36: #{tpu_custom_call.1} parent=31 // pred_fallthru
        _
      %v254 = vld [vmem:[%s225] sm:$0xff]
      %v255 = vld [vmem:[%s225 + $0x10] sm:$0xff]
      %v256 = vld [vmem:[%s225 + $0x20] sm:$0xff]
      %v257 = vld [vmem:[%s225 + $0x30] sm:$0xff]
      %v258 = vld [vmem:[%s225 + $0x40] sm:$0xff]
      %v259 = vld [vmem:[%s225 + $0x50] sm:$0xff]
      %v260 = vld [vmem:[%s225 + $0x60] sm:$0xff]
      %v261 = vld [vmem:[%s225 + $0x70] sm:$0xff]
      %v262 = vld [vmem:[%s231] sm:$0xf]
      %v263 = vld [vmem:[%s225 + $0x1] sm:$0xff]
      %v264 = vld [vmem:[%s225 + $0x11] sm:$0xff]
      %v265 = vld [vmem:[%s225 + $0x21] sm:$0xff]
      %v266 = vld [vmem:[%s225 + $0x31] sm:$0xff]
      %v267 = vld [vmem:[%s225 + $0x41] sm:$0xff]
      %v268 = vld [vmem:[%s225 + $0x51] sm:$0xff]
      %v269 = vld [vmem:[%s225 + $0x61] sm:$0xff]
      %v270 = vld [vmem:[%s225 + $0x71] sm:$0xff]
      %s271 = scalar_lea.vmem %s231, 4
      %v272 = vld [vmem:[%s271] sm:$0xf]
      %vm273 = vcmask 31744
      %v275 = vsel %vm273, %v263, 0
      %v278 = vsel %vm273, %v264, 0
      %v281 = vsel %vm273, %v265, 0
      %v284 = vsel %vm273, %v266, 0
      %v287 = vsel %vm273, %v267, 0
      %v290 = vsel %vm273, %v268, 0
      %v293 = vsel %vm273, %v269, 0
      %v296 = vsel %vm273, %v270, 0
      %vm298 = vcmask 1043456
      %v300 = vsel %vm298, %v272, 0
      %302 = vmatpush.msra.mxu0 0.0
      %303 = vmatpush.msra.mxu0 0.0
      %304 = vmatpush.msra.mxu0 0.0
      %305 = vmatpush.msra.mxu0 0.0
      %306 = vmatpush.msra.mxu0 0.0
      %307 = vmatpush.msra.mxu0 0.0
      %308 = vmatpush.msra.mxu0 0.0
      %309 = vmatpush.msra.mxu0 0.0
      %310 = vmatpush.msra.mxu0 0.0
      %311 = vmatpush.msra.mxu0 0.0
      %312 = vmatpush.msra.mxu0 0.0
      %313 = vmatpush.msra.mxu0 0.0
      %314 = vmatpush.msra.mxu0 0.0
      %315 = vmatpush.msra.mxu0 0.0
      %316 = vmatpush.msra.mxu0 0.0
      %317 = vmatpush.msra.mxu0 %v300
      %318 = vmatmul.f32.gmra.mxu0 %v275
      %v319 = vpop.f32.mrf.mxu0
      %v320 = vadd.f32 0.0, %v319
      %321 = vmatmul.f32.gmra.mxu0 %v278
      %v322 = vpop.f32.mrf.mxu0
      %v323 = vadd.f32 0.0, %v322
      %324 = vmatmul.f32.gmra.mxu0 %v281
      %v325 = vpop.f32.mrf.mxu0
      %v326 = vadd.f32 0.0, %v325
      %327 = vmatmul.f32.gmra.mxu0 %v284
      %v328 = vpop.f32.mrf.mxu0
      %v329 = vadd.f32 0.0, %v328
      %330 = vmatmul.f32.gmra.mxu0 %v287
      %v331 = vpop.f32.mrf.mxu0
      %v332 = vadd.f32 0.0, %v331
      %333 = vmatmul.f32.gmra.mxu0 %v290
      %v334 = vpop.f32.mrf.mxu0
      %v335 = vadd.f32 0.0, %v334
      %336 = vmatmul.f32.gmra.mxu0 %v293
      %v337 = vpop.f32.mrf.mxu0
      %v338 = vadd.f32 0.0, %v337
      %339 = vmatmul.f32.gmra.mxu0 %v296
      %v340 = vpop.f32.mrf.mxu0
      %v341 = vadd.f32 0.0, %v340
      %342 = vdwg.mxu0
      %v344 = vsel %vm273, %v254, 0
      %v347 = vsel %vm273, %v255, 0
      %v350 = vsel %vm273, %v256, 0
      %v353 = vsel %vm273, %v257, 0
      %v356 = vsel %vm273, %v258, 0
      %v359 = vsel %vm273, %v259, 0
      %v362 = vsel %vm273, %v260, 0
      %v365 = vsel %vm273, %v261, 0
      %v368 = vsel %vm298, %v262, 0
      %370 = vmatpush.msra.mxu0 0.0
      %371 = vmatpush.msra.mxu0 0.0
      %372 = vmatpush.msra.mxu0 0.0
      %373 = vmatpush.msra.mxu0 0.0
      %374 = vmatpush.msra.mxu0 0.0
      %375 = vmatpush.msra.mxu0 0.0
      %376 = vmatpush.msra.mxu0 0.0
      %377 = vmatpush.msra.mxu0 0.0
      %378 = vmatpush.msra.mxu0 0.0
      %379 = vmatpush.msra.mxu0 0.0
      %380 = vmatpush.msra.mxu0 0.0
      %381 = vmatpush.msra.mxu0 0.0
      %382 = vmatpush.msra.mxu0 0.0
      %383 = vmatpush.msra.mxu0 0.0
      %384 = vmatpush.msra.mxu0 0.0
      %385 = vmatpush.msra.mxu0 %v368
      %386 = vmatmul.f32.gmra.mxu0 %v344
      %v387 = vpop.f32.mrf.mxu0
      %v388 = vadd.f32 %v320, %v387
      %389 = vmatmul.f32.gmra.mxu0 %v347
      %v390 = vpop.f32.mrf.mxu0
      %v391 = vadd.f32 %v323, %v390
      %392 = vmatmul.f32.gmra.mxu0 %v350
      %v393 = vpop.f32.mrf.mxu0
      %v394 = vadd.f32 %v326, %v393
      %395 = vmatmul.f32.gmra.mxu0 %v353
      %v396 = vpop.f32.mrf.mxu0
      %v397 = vadd.f32 %v329, %v396
      %398 = vmatmul.f32.gmra.mxu0 %v356
      %v399 = vpop.f32.mrf.mxu0
      %v400 = vadd.f32 %v332, %v399
      %401 = vmatmul.f32.gmra.mxu0 %v359
      %v402 = vpop.f32.mrf.mxu0
      %v403 = vadd.f32 %v335, %v402
      %404 = vmatmul.f32.gmra.mxu0 %v362
      %v405 = vpop.f32.mrf.mxu0
      %v406 = vadd.f32 %v338, %v405
      %407 = vmatmul.f32.gmra.mxu0 %v365
      %v408 = vpop.f32.mrf.mxu0
      %v409 = vadd.f32 %v341, %v408
      %410 = vdwg.mxu0
      %v411 = vld [vmem:[%s225 + $0x2] sm:$0xff]
      %v412 = vld [vmem:[%s225 + $0x12] sm:$0xff]
      %v413 = vld [vmem:[%s225 + $0x22] sm:$0xff]
      %v414 = vld [vmem:[%s225 + $0x32] sm:$0xff]
      %v415 = vld [vmem:[%s225 + $0x42] sm:$0xff]
      %v416 = vld [vmem:[%s225 + $0x52] sm:$0xff]
      %v417 = vld [vmem:[%s225 + $0x62] sm:$0xff]
      %v418 = vld [vmem:[%s225 + $0x72] sm:$0xff]
      %s419 = scalar_lea.vmem %s231, 8
      %v420 = vld [vmem:[%s419] sm:$0xf]
      %v422 = vsel %vm273, %v411, 0
      %v425 = vsel %vm273, %v412, 0
      %v428 = vsel %vm273, %v413, 0
      %v431 = vsel %vm273, %v414, 0
      %v434 = vsel %vm273, %v415, 0
      %v437 = vsel %vm273, %v416, 0
      %v440 = vsel %vm273, %v417, 0
      %v443 = vsel %vm273, %v418, 0
      %v446 = vsel %vm298, %v420, 0
      %448 = vmatpush.msra.mxu0 0.0
      %449 = vmatpush.msra.mxu0 0.0
      %450 = vmatpush.msra.mxu0 0.0
      %451 = vmatpush.msra.mxu0 0.0
      %452 = vmatpush.msra.mxu0 0.0
      %453 = vmatpush.msra.mxu0 0.0
      %454 = vmatpush.msra.mxu0 0.0
      %455 = vmatpush.msra.mxu0 0.0
      %456 = vmatpush.msra.mxu0 0.0
      %457 = vmatpush.msra.mxu0 0.0
      %458 = vmatpush.msra.mxu0 0.0
      %459 = vmatpush.msra.mxu0 0.0
      %460 = vmatpush.msra.mxu0 0.0
      %461 = vmatpush.msra.mxu0 0.0
      %462 = vmatpush.msra.mxu0 0.0
      %463 = vmatpush.msra.mxu0 %v446
      %464 = vmatmul.f32.gmra.mxu0 %v422
      %v465 = vpop.f32.mrf.mxu0
      %v466 = vadd.f32 0.0, %v465
      %467 = vmatmul.f32.gmra.mxu0 %v425
      %v468 = vpop.f32.mrf.mxu0
      %v469 = vadd.f32 0.0, %v468
      %470 = vmatmul.f32.gmra.mxu0 %v428
      %v471 = vpop.f32.mrf.mxu0
      %v472 = vadd.f32 0.0, %v471
      %473 = vmatmul.f32.gmra.mxu0 %v431
      %v474 = vpop.f32.mrf.mxu0
      %v475 = vadd.f32 0.0, %v474
      %476 = vmatmul.f32.gmra.mxu0 %v434
      %v477 = vpop.f32.mrf.mxu0
      %v478 = vadd.f32 0.0, %v477
      %479 = vmatmul.f32.gmra.mxu0 %v437
      %v480 = vpop.f32.mrf.mxu0
      %v481 = vadd.f32 0.0, %v480
      %482 = vmatmul.f32.gmra.mxu0 %v440
      %v483 = vpop.f32.mrf.mxu0
      %v484 = vadd.f32 0.0, %v483
      %485 = vmatmul.f32.gmra.mxu0 %v443
      %v486 = vpop.f32.mrf.mxu0
      %v487 = vadd.f32 0.0, %v486
      %488 = vdwg.mxu0
      %v489 = vadd.f32 %v388, %v466
      %v490 = vadd.f32 %v391, %v469
      %v491 = vadd.f32 %v394, %v472
      %v492 = vadd.f32 %v397, %v475
      %v493 = vadd.f32 %v400, %v478
      %v494 = vadd.f32 %v403, %v481
      %v495 = vadd.f32 %v406, %v484
      %v496 = vadd.f32 %v409, %v487
      %s497 = scalar_lea.vmem %s225, 16
      %v498 = vld [vmem:[%s497] sm:$0xff]
      %v499 = vld [vmem:[%s497 + $0x10] sm:$0xff]
      %v500 = vld [vmem:[%s497 + $0x20] sm:$0xff]
      %v501 = vld [vmem:[%s497 + $0x30] sm:$0xff]
      %v502 = vld [vmem:[%s497 + $0x40] sm:$0xff]
      %v503 = vld [vmem:[%s497 + $0x50] sm:$0xff]
      %v504 = vld [vmem:[%s497 + $0x60] sm:$0xff]
      %v505 = vld [vmem:[%s497 + $0x70] sm:$0xff]
      %s506 = scalar_lea.vmem %s231, 12
      %v507 = vld [vmem:[%s506] sm:$0xf]
      %v509 = vsel %vm273, %v498, 0
      %v512 = vsel %vm273, %v499, 0
      %v515 = vsel %vm273, %v500, 0
      %v518 = vsel %vm273, %v501, 0
      %v521 = vsel %vm273, %v502, 0
      %v524 = vsel %vm273, %v503, 0
      %v527 = vsel %vm273, %v504, 0
      %v530 = vsel %vm273, %v505, 0
      %v533 = vsel %vm298, %v507, 0
      %535 = vmatpush.msra.mxu0 0.0
      %536 = vmatpush.msra.mxu0 0.0
      %537 = vmatpush.msra.mxu0 0.0
      %538 = vmatpush.msra.mxu0 0.0
      %539 = vmatpush.msra.mxu0 0.0
      %540 = vmatpush.msra.mxu0 0.0
      %541 = vmatpush.msra.mxu0 0.0
      %542 = vmatpush.msra.mxu0 0.0
      %543 = vmatpush.msra.mxu0 0.0
      %544 = vmatpush.msra.mxu0 0.0
      %545 = vmatpush.msra.mxu0 0.0
      %546 = vmatpush.msra.mxu0 0.0
      %547 = vmatpush.msra.mxu0 0.0
      %548 = vmatpush.msra.mxu0 0.0
      %549 = vmatpush.msra.mxu0 0.0
      %550 = vmatpush.msra.mxu0 %v533
      %551 = vmatmul.f32.gmra.mxu0 %v509
      %v552 = vpop.f32.mrf.mxu0
      %v553 = vadd.f32 0.0, %v552
      %554 = vmatmul.f32.gmra.mxu0 %v512
      %v555 = vpop.f32.mrf.mxu0
      %v556 = vadd.f32 0.0, %v555
      %557 = vmatmul.f32.gmra.mxu0 %v515
      %v558 = vpop.f32.mrf.mxu0
      %v559 = vadd.f32 0.0, %v558
      %560 = vmatmul.f32.gmra.mxu0 %v518
      %v561 = vpop.f32.mrf.mxu0
      %v562 = vadd.f32 0.0, %v561
      %563 = vmatmul.f32.gmra.mxu0 %v521
      %v564 = vpop.f32.mrf.mxu0
      %v565 = vadd.f32 0.0, %v564
      %566 = vmatmul.f32.gmra.mxu0 %v524
      %v567 = vpop.f32.mrf.mxu0
      %v568 = vadd.f32 0.0, %v567
      %569 = vmatmul.f32.gmra.mxu0 %v527
      %v570 = vpop.f32.mrf.mxu0
      %v571 = vadd.f32 0.0, %v570
      %572 = vmatmul.f32.gmra.mxu0 %v530
      %v573 = vpop.f32.mrf.mxu0
      %v574 = vadd.f32 0.0, %v573
      %575 = vdwg.mxu0
      %v576 = vadd.f32 %v489, %v553
      %v577 = vadd.f32 %v490, %v556
      %v578 = vadd.f32 %v491, %v559
      %v579 = vadd.f32 %v492, %v562
      %v580 = vadd.f32 %v493, %v565
      %v581 = vadd.f32 %v494, %v568
      %v582 = vadd.f32 %v495, %v571
      %v583 = vadd.f32 %v496, %v574
      %v584 = vld [vmem:[%s497 + $0x1] sm:$0xff]
      %v585 = vld [vmem:[%s497 + $0x11] sm:$0xff]
      %v586 = vld [vmem:[%s497 + $0x21] sm:$0xff]
      %v587 = vld [vmem:[%s497 + $0x31] sm:$0xff]
      %v588 = vld [vmem:[%s497 + $0x41] sm:$0xff]
      %v589 = vld [vmem:[%s497 + $0x51] sm:$0xff]
      %v590 = vld [vmem:[%s497 + $0x61] sm:$0xff]
      %v591 = vld [vmem:[%s497 + $0x71] sm:$0xff]
      %s592 = scalar_lea.vmem %s231, 16
      %v593 = vld [vmem:[%s592] sm:$0xf]
      %v595 = vsel %vm273, %v584, 0
      %v598 = vsel %vm273, %v585, 0
      %v601 = vsel %vm273, %v586, 0
      %v604 = vsel %vm273, %v587, 0
      %v607 = vsel %vm273, %v588, 0
      %v610 = vsel %vm273, %v589, 0
      %v613 = vsel %vm273, %v590, 0
      %v616 = vsel %vm273, %v591, 0
      %v619 = vsel %vm298, %v593, 0
      %621 = vmatpush.msra.mxu0 0.0
      %622 = vmatpush.msra.mxu0 0.0
      %623 = vmatpush.msra.mxu0 0.0
      %624 = vmatpush.msra.mxu0 0.0
      %625 = vmatpush.msra.mxu0 0.0
      %626 = vmatpush.msra.mxu0 0.0
      %627 = vmatpush.msra.mxu0 0.0
      %628 = vmatpush.msra.mxu0 0.0
      %629 = vmatpush.msra.mxu0 0.0
      %630 = vmatpush.msra.mxu0 0.0
      %631 = vmatpush.msra.mxu0 0.0
      %632 = vmatpush.msra.mxu0 0.0
      %633 = vmatpush.msra.mxu0 0.0
      %634 = vmatpush.msra.mxu0 0.0
      %635 = vmatpush.msra.mxu0 0.0
      %636 = vmatpush.msra.mxu0 %v619
      %637 = vmatmul.f32.gmra.mxu0 %v595
      %v638 = vpop.f32.mrf.mxu0
      %v639 = vadd.f32 0.0, %v638
      %640 = vmatmul.f32.gmra.mxu0 %v598
      %v641 = vpop.f32.mrf.mxu0
      %v642 = vadd.f32 0.0, %v641
      %643 = vmatmul.f32.gmra.mxu0 %v601
      %v644 = vpop.f32.mrf.mxu0
      %v645 = vadd.f32 0.0, %v644
      %646 = vmatmul.f32.gmra.mxu0 %v604
      %v647 = vpop.f32.mrf.mxu0
      %v648 = vadd.f32 0.0, %v647
      %649 = vmatmul.f32.gmra.mxu0 %v607
      %v650 = vpop.f32.mrf.mxu0
      %v651 = vadd.f32 0.0, %v650
      %652 = vmatmul.f32.gmra.mxu0 %v610
      %v653 = vpop.f32.mrf.mxu0
      %v654 = vadd.f32 0.0, %v653
      %655 = vmatmul.f32.gmra.mxu0 %v613
      %v656 = vpop.f32.mrf.mxu0
      %v657 = vadd.f32 0.0, %v656
      %658 = vmatmul.f32.gmra.mxu0 %v616
      %v659 = vpop.f32.mrf.mxu0
      %v660 = vadd.f32 0.0, %v659
      %661 = vdwg.mxu0
      %v662 = vadd.f32 %v576, %v639
      %v663 = vadd.f32 %v577, %v642
      %v664 = vadd.f32 %v578, %v645
      %v665 = vadd.f32 %v579, %v648
      %v666 = vadd.f32 %v580, %v651
      %v667 = vadd.f32 %v581, %v654
      %v668 = vadd.f32 %v582, %v657
      %v669 = vadd.f32 %v583, %v660
      %v670 = vld [vmem:[%s497 + $0x2] sm:$0xff]
      %v671 = vld [vmem:[%s497 + $0x12] sm:$0xff]
      %v672 = vld [vmem:[%s497 + $0x22] sm:$0xff]
      %v673 = vld [vmem:[%s497 + $0x32] sm:$0xff]
      %v674 = vld [vmem:[%s497 + $0x42] sm:$0xff]
      %v675 = vld [vmem:[%s497 + $0x52] sm:$0xff]
      %v676 = vld [vmem:[%s497 + $0x62] sm:$0xff]
      %v677 = vld [vmem:[%s497 + $0x72] sm:$0xff]
      %s678 = scalar_lea.vmem %s231, 20
      %v679 = vld [vmem:[%s678] sm:$0xf]
      %v681 = vsel %vm273, %v670, 0
      %v684 = vsel %vm273, %v671, 0
      %v687 = vsel %vm273, %v672, 0
      %v690 = vsel %vm273, %v673, 0
      %v693 = vsel %vm273, %v674, 0
      %v696 = vsel %vm273, %v675, 0
      %v699 = vsel %vm273, %v676, 0
      %v702 = vsel %vm273, %v677, 0
      %v705 = vsel %vm298, %v679, 0
      %707 = vmatpush.msra.mxu0 0.0
      %708 = vmatpush.msra.mxu0 0.0
      %709 = vmatpush.msra.mxu0 0.0
      %710 = vmatpush.msra.mxu0 0.0
      %711 = vmatpush.msra.mxu0 0.0
      %712 = vmatpush.msra.mxu0 0.0
      %713 = vmatpush.msra.mxu0 0.0
      %714 = vmatpush.msra.mxu0 0.0
      %715 = vmatpush.msra.mxu0 0.0
      %716 = vmatpush.msra.mxu0 0.0
      %717 = vmatpush.msra.mxu0 0.0
      %718 = vmatpush.msra.mxu0 0.0
      %719 = vmatpush.msra.mxu0 0.0
      %720 = vmatpush.msra.mxu0 0.0
      %721 = vmatpush.msra.mxu0 0.0
      %722 = vmatpush.msra.mxu0 %v705
      %723 = vmatmul.f32.gmra.mxu0 %v681
      %v724 = vpop.f32.mrf.mxu0
      %v725 = vadd.f32 0.0, %v724
      %726 = vmatmul.f32.gmra.mxu0 %v684
      %v727 = vpop.f32.mrf.mxu0
      %v728 = vadd.f32 0.0, %v727
      %729 = vmatmul.f32.gmra.mxu0 %v687
      %v730 = vpop.f32.mrf.mxu0
      %v731 = vadd.f32 0.0, %v730
      %732 = vmatmul.f32.gmra.mxu0 %v690
      %v733 = vpop.f32.mrf.mxu0
      %v734 = vadd.f32 0.0, %v733
      %735 = vmatmul.f32.gmra.mxu0 %v693
      %v736 = vpop.f32.mrf.mxu0
      %v737 = vadd.f32 0.0, %v736
      %738 = vmatmul.f32.gmra.mxu0 %v696
      %v739 = vpop.f32.mrf.mxu0
      %v740 = vadd.f32 0.0, %v739
      %741 = vmatmul.f32.gmra.mxu0 %v699
      %v742 = vpop.f32.mrf.mxu0
      %v743 = vadd.f32 0.0, %v742
      %744 = vmatmul.f32.gmra.mxu0 %v702
      %v745 = vpop.f32.mrf.mxu0
      %v746 = vadd.f32 0.0, %v745
      %747 = vdwg.mxu0
      %v748 = vadd.f32 %v662, %v725
      %v749 = vadd.f32 %v663, %v728
      %v750 = vadd.f32 %v664, %v731
      %v751 = vadd.f32 %v665, %v734
      %v752 = vadd.f32 %v666, %v737
      %v753 = vadd.f32 %v667, %v740
      %v754 = vadd.f32 %v668, %v743
      %v755 = vadd.f32 %v669, %v746
      %s756 = scalar_lea.vmem %s225, 32
      %v757 = vld [vmem:[%s756] sm:$0xff]
      %v758 = vld [vmem:[%s756 + $0x10] sm:$0xff]
      %v759 = vld [vmem:[%s756 + $0x20] sm:$0xff]
      %v760 = vld [vmem:[%s756 + $0x30] sm:$0xff]
      %v761 = vld [vmem:[%s756 + $0x40] sm:$0xff]
      %v762 = vld [vmem:[%s756 + $0x50] sm:$0xff]
      %v763 = vld [vmem:[%s756 + $0x60] sm:$0xff]
      %v764 = vld [vmem:[%s756 + $0x70] sm:$0xff]
      %s765 = scalar_lea.vmem %s231, 24
      %v766 = vld [vmem:[%s765] sm:$0xf]
      %v768 = vsel %vm273, %v757, 0
      %v771 = vsel %vm273, %v758, 0
      %v774 = vsel %vm273, %v759, 0
      %v777 = vsel %vm273, %v760, 0
      %v780 = vsel %vm273, %v761, 0
      %v783 = vsel %vm273, %v762, 0
      %v786 = vsel %vm273, %v763, 0
      %v789 = vsel %vm273, %v764, 0
      %v792 = vsel %vm298, %v766, 0
      %794 = vmatpush.msra.mxu0 0.0
      %795 = vmatpush.msra.mxu0 0.0
      %796 = vmatpush.msra.mxu0 0.0
      %797 = vmatpush.msra.mxu0 0.0
      %798 = vmatpush.msra.mxu0 0.0
      %799 = vmatpush.msra.mxu0 0.0
      %800 = vmatpush.msra.mxu0 0.0
      %801 = vmatpush.msra.mxu0 0.0
      %802 = vmatpush.msra.mxu0 0.0
      %803 = vmatpush.msra.mxu0 0.0
      %804 = vmatpush.msra.mxu0 0.0
      %805 = vmatpush.msra.mxu0 0.0
      %806 = vmatpush.msra.mxu0 0.0
      %807 = vmatpush.msra.mxu0 0.0
      %808 = vmatpush.msra.mxu0 0.0
      %809 = vmatpush.msra.mxu0 %v792
      %810 = vmatmul.f32.gmra.mxu0 %v768
      %v811 = vpop.f32.mrf.mxu0
      %v812 = vadd.f32 0.0, %v811
      %813 = vmatmul.f32.gmra.mxu0 %v771
      %v814 = vpop.f32.mrf.mxu0
      %v815 = vadd.f32 0.0, %v814
      %816 = vmatmul.f32.gmra.mxu0 %v774
      %v817 = vpop.f32.mrf.mxu0
      %v818 = vadd.f32 0.0, %v817
      %819 = vmatmul.f32.gmra.mxu0 %v777
      %v820 = vpop.f32.mrf.mxu0
      %v821 = vadd.f32 0.0, %v820
      %822 = vmatmul.f32.gmra.mxu0 %v780
      %v823 = vpop.f32.mrf.mxu0
      %v824 = vadd.f32 0.0, %v823
      %825 = vmatmul.f32.gmra.mxu0 %v783
      %v826 = vpop.f32.mrf.mxu0
      %v827 = vadd.f32 0.0, %v826
      %828 = vmatmul.f32.gmra.mxu0 %v786
      %v829 = vpop.f32.mrf.mxu0
      %v830 = vadd.f32 0.0, %v829
      %831 = vmatmul.f32.gmra.mxu0 %v789
      %v832 = vpop.f32.mrf.mxu0
      %v833 = vadd.f32 0.0, %v832
      %834 = vdwg.mxu0
      %v835 = vadd.f32 %v748, %v812
      %v836 = vadd.f32 %v749, %v815
      %v837 = vadd.f32 %v750, %v818
      %v838 = vadd.f32 %v751, %v821
      %v839 = vadd.f32 %v752, %v824
      %v840 = vadd.f32 %v753, %v827
      %v841 = vadd.f32 %v754, %v830
      %v842 = vadd.f32 %v755, %v833
      %v843 = vld [vmem:[%s756 + $0x1] sm:$0xff]
      %v844 = vld [vmem:[%s756 + $0x11] sm:$0xff]
      %v845 = vld [vmem:[%s756 + $0x21] sm:$0xff]
      %v846 = vld [vmem:[%s756 + $0x31] sm:$0xff]
      %v847 = vld [vmem:[%s756 + $0x41] sm:$0xff]
      %v848 = vld [vmem:[%s756 + $0x51] sm:$0xff]
      %v849 = vld [vmem:[%s756 + $0x61] sm:$0xff]
      %v850 = vld [vmem:[%s756 + $0x71] sm:$0xff]
      %s851 = scalar_lea.vmem %s231, 28
      %v852 = vld [vmem:[%s851] sm:$0xf]
      %v854 = vsel %vm273, %v843, 0
      %v857 = vsel %vm273, %v844, 0
      %v860 = vsel %vm273, %v845, 0
      %v863 = vsel %vm273, %v846, 0
      %v866 = vsel %vm273, %v847, 0
      %v869 = vsel %vm273, %v848, 0
      %v872 = vsel %vm273, %v849, 0
      %v875 = vsel %vm273, %v850, 0
      %v878 = vsel %vm298, %v852, 0
      %880 = vmatpush.msra.mxu0 0.0
      %881 = vmatpush.msra.mxu0 0.0
      %882 = vmatpush.msra.mxu0 0.0
      %883 = vmatpush.msra.mxu0 0.0
      %884 = vmatpush.msra.mxu0 0.0
      %885 = vmatpush.msra.mxu0 0.0
      %886 = vmatpush.msra.mxu0 0.0
      %887 = vmatpush.msra.mxu0 0.0
      %888 = vmatpush.msra.mxu0 0.0
      %889 = vmatpush.msra.mxu0 0.0
      %890 = vmatpush.msra.mxu0 0.0
      %891 = vmatpush.msra.mxu0 0.0
      %892 = vmatpush.msra.mxu0 0.0
      %893 = vmatpush.msra.mxu0 0.0
      %894 = vmatpush.msra.mxu0 0.0
      %895 = vmatpush.msra.mxu0 %v878
      %896 = vmatmul.f32.gmra.mxu0 %v854
      %v897 = vpop.f32.mrf.mxu0
      %v898 = vadd.f32 0.0, %v897
      %899 = vmatmul.f32.gmra.mxu0 %v857
      %v900 = vpop.f32.mrf.mxu0
      %v901 = vadd.f32 0.0, %v900
      %902 = vmatmul.f32.gmra.mxu0 %v860
      %v903 = vpop.f32.mrf.mxu0
      %v904 = vadd.f32 0.0, %v903
      %905 = vmatmul.f32.gmra.mxu0 %v863
      %v906 = vpop.f32.mrf.mxu0
      %v907 = vadd.f32 0.0, %v906
      %908 = vmatmul.f32.gmra.mxu0 %v866
      %v909 = vpop.f32.mrf.mxu0
      %v910 = vadd.f32 0.0, %v909
      %911 = vmatmul.f32.gmra.mxu0 %v869
      %v912 = vpop.f32.mrf.mxu0
      %v913 = vadd.f32 0.0, %v912
      %914 = vmatmul.f32.gmra.mxu0 %v872
      %v915 = vpop.f32.mrf.mxu0
      %v916 = vadd.f32 0.0, %v915
      %917 = vmatmul.f32.gmra.mxu0 %v875
      %v918 = vpop.f32.mrf.mxu0
      %v919 = vadd.f32 0.0, %v918
      %920 = vdwg.mxu0
      %v921 = vadd.f32 %v835, %v898
      %v922 = vadd.f32 %v836, %v901
      %v923 = vadd.f32 %v837, %v904
      %v924 = vadd.f32 %v838, %v907
      %v925 = vadd.f32 %v839, %v910
      %v926 = vadd.f32 %v840, %v913
      %v927 = vadd.f32 %v841, %v916
      %v928 = vadd.f32 %v842, %v919
      %v929 = vld [vmem:[%s756 + $0x2] sm:$0xff]
      %v930 = vld [vmem:[%s756 + $0x12] sm:$0xff]
      %v931 = vld [vmem:[%s756 + $0x22] sm:$0xff]
      %v932 = vld [vmem:[%s756 + $0x32] sm:$0xff]
      %v933 = vld [vmem:[%s756 + $0x42] sm:$0xff]
      %v934 = vld [vmem:[%s756 + $0x52] sm:$0xff]
      %v935 = vld [vmem:[%s756 + $0x62] sm:$0xff]
      %v936 = vld [vmem:[%s756 + $0x72] sm:$0xff]
      %s937 = scalar_lea.vmem %s231, 32
      %v938 = vld [vmem:[%s937] sm:$0xf]
      %v940 = vsel %vm273, %v929, 0
      %v943 = vsel %vm273, %v930, 0
      %v946 = vsel %vm273, %v931, 0
      %v949 = vsel %vm273, %v932, 0
      %v952 = vsel %vm273, %v933, 0
      %v955 = vsel %vm273, %v934, 0
      %v958 = vsel %vm273, %v935, 0
      %v961 = vsel %vm273, %v936, 0
      %v964 = vsel %vm298, %v938, 0
      %966 = vmatpush.msra.mxu0 0.0
      %967 = vmatpush.msra.mxu0 0.0
      %968 = vmatpush.msra.mxu0 0.0
      %969 = vmatpush.msra.mxu0 0.0
      %970 = vmatpush.msra.mxu0 0.0
      %971 = vmatpush.msra.mxu0 0.0
      %972 = vmatpush.msra.mxu0 0.0
      %973 = vmatpush.msra.mxu0 0.0
      %974 = vmatpush.msra.mxu0 0.0
      %975 = vmatpush.msra.mxu0 0.0
      %976 = vmatpush.msra.mxu0 0.0
      %977 = vmatpush.msra.mxu0 0.0
      %978 = vmatpush.msra.mxu0 0.0
      %979 = vmatpush.msra.mxu0 0.0
      %980 = vmatpush.msra.mxu0 0.0
      %981 = vmatpush.msra.mxu0 %v964
      %982 = vmatmul.f32.gmra.mxu0 %v940
      %v983 = vpop.f32.mrf.mxu0
      %v984 = vadd.f32 0.0, %v983
      %985 = vmatmul.f32.gmra.mxu0 %v943
      %v986 = vpop.f32.mrf.mxu0
      %v987 = vadd.f32 0.0, %v986
      %988 = vmatmul.f32.gmra.mxu0 %v946
      %v989 = vpop.f32.mrf.mxu0
      %v990 = vadd.f32 0.0, %v989
      %991 = vmatmul.f32.gmra.mxu0 %v949
      %v992 = vpop.f32.mrf.mxu0
      %v993 = vadd.f32 0.0, %v992
      %994 = vmatmul.f32.gmra.mxu0 %v952
      %v995 = vpop.f32.mrf.mxu0
      %v996 = vadd.f32 0.0, %v995
      %997 = vmatmul.f32.gmra.mxu0 %v955
      %v998 = vpop.f32.mrf.mxu0
      %v999 = vadd.f32 0.0, %v998
      %1000 = vmatmul.f32.gmra.mxu0 %v958
      %v1001 = vpop.f32.mrf.mxu0
      %v1002 = vadd.f32 0.0, %v1001
      %1003 = vmatmul.f32.gmra.mxu0 %v961
      %v1004 = vpop.f32.mrf.mxu0
      %v1005 = vadd.f32 0.0, %v1004
      %1006 = vdwg.mxu0
      %v1007 = vadd.f32 %v921, %v984
      %v1008 = vadd.f32 %v922, %v987
      %v1009 = vadd.f32 %v923, %v990
      %v1010 = vadd.f32 %v924, %v993
      %v1011 = vadd.f32 %v925, %v996
      %v1012 = vadd.f32 %v926, %v999
      %v1013 = vadd.f32 %v927, %v1002
      %v1014 = vadd.f32 %v928, %v1005
      %v1015 = vld [vmem:[#allocation2] sm:$0xff]
      %v1016 = vld [vmem:[#allocation2 + $0x8] sm:$0xff]
      %v1017 = vld [vmem:[#allocation2 + $0x10] sm:$0xff]
      %v1018 = vld [vmem:[#allocation2 + $0x18] sm:$0xff]
      %v1019 = vld [vmem:[#allocation2 + $0x20] sm:$0xff]
      %v1020 = vld [vmem:[#allocation2 + $0x28] sm:$0xff]
      %v1021 = vld [vmem:[#allocation2 + $0x30] sm:$0xff]
      %v1022 = vld [vmem:[#allocation2 + $0x38] sm:$0xff]
      %v1023 = vadd.f32 %v1015, %v1007
      %v1024 = vadd.f32 %v1016, %v1008
      %v1025 = vadd.f32 %v1017, %v1009
      %v1026 = vadd.f32 %v1018, %v1010
      %v1027 = vadd.f32 %v1019, %v1011
      %v1028 = vadd.f32 %v1020, %v1012
      %v1029 = vadd.f32 %v1021, %v1013
      %v1030 = vadd.f32 %v1022, %v1014
      %vm1031 = vcmask 64512
      %1032 = vst.msk [vmem:[#allocation2] sm:$0xff] %vm1031, %v1023
      %1033 = vst.msk [vmem:[#allocation2 + $0x8] sm:$0xff] %vm1031, %v1024
      %1034 = vst.msk [vmem:[#allocation2 + $0x10] sm:$0xff] %vm1031, %v1025
      %1035 = vst.msk [vmem:[#allocation2 + $0x18] sm:$0xff] %vm1031, %v1026
      %1036 = vst.msk [vmem:[#allocation2 + $0x20] sm:$0xff] %vm1031, %v1027
      %1037 = vst.msk [vmem:[#allocation2 + $0x28] sm:$0xff] %vm1031, %v1028
      %1038 = vst.msk [vmem:[#allocation2 + $0x30] sm:$0xff] %vm1031, %v1029
      %1039 = vst.msk [vmem:[#allocation2 + $0x38] sm:$0xff] %vm1031, %v1030
      %p1040 = scmp.eq.s32.totalorder %s21, 2
      // Predicated region
      $region37: #{tpu_custom_call.1} parent=31 // pred_check
        %p1041 = pneg %p1040
      $region38: #{tpu_custom_call.1} parent=31 // pred_check_branch
        %1043 = sbr.rel (%p1041) target = $region40
      $region39: #{tpu_custom_call.1} parent=31 // pred_region
        %v1044 = vld [vmem:[#allocation2] sm:$0xff]
        %v1045 = vld [vmem:[#allocation2 + $0x8] sm:$0xff]
        %v1046 = vld [vmem:[#allocation2 + $0x10] sm:$0xff]
        %v1047 = vld [vmem:[#allocation2 + $0x18] sm:$0xff]
        %v1048 = vld [vmem:[#allocation2 + $0x20] sm:$0xff]
        %v1049 = vld [vmem:[#allocation2 + $0x28] sm:$0xff]
        %v1050 = vld [vmem:[#allocation2 + $0x30] sm:$0xff]
        %v1051 = vld [vmem:[#allocation2 + $0x38] sm:$0xff]
        %v1052 = vld [vmem:[%s2] sm:$0x1]
        %v1054 = vperm.slane %v1052, 0
        %v1056 = vadd.f32 %v1044, %v1054
        %v1057 = vadd.f32 %v1045, %v1054
        %v1058 = vadd.f32 %v1046, %v1054
        %v1059 = vadd.f32 %v1047, %v1054
        %v1060 = vadd.f32 %v1048, %v1054
        %v1061 = vadd.f32 %v1049, %v1054
        %v1062 = vadd.f32 %v1050, %v1054
        %v1063 = vadd.f32 %v1051, %v1054
        %v1064 = vxor.u32 %v1056, 2147483648
        %v1065 = vxor.u32 %v1057, 2147483648
        %v1066 = vxor.u32 %v1058, 2147483648
        %v1067 = vxor.u32 %v1059, 2147483648
        %v1068 = vxor.u32 %v1060, 2147483648
        %v1069 = vxor.u32 %v1061, 2147483648
        %v1070 = vxor.u32 %v1062, 2147483648
        %v1071 = vxor.u32 %v1063, 2147483648
        %v1072 = vmul.f32 %v1064, 1.442695
        %v1073 = vpow.pop %v1072
        %v1074 = vmul.f32 %v1065, 1.442695
        %v1075 = vpow.pop %v1074
        %v1076 = vmul.f32 %v1066, 1.442695
        %v1077 = vpow.pop %v1076
        %v1078 = vmul.f32 %v1067, 1.442695
        %v1079 = vpow.pop %v1078
        %v1080 = vmul.f32 %v1068, 1.442695
        %v1081 = vpow.pop %v1080
        %v1082 = vmul.f32 %v1069, 1.442695
        %v1083 = vpow.pop %v1082
        %v1084 = vmul.f32 %v1070, 1.442695
        %v1085 = vpow.pop %v1084
        %v1086 = vmul.f32 %v1071, 1.442695
        %v1087 = vpow.pop %v1086
        %v1088 = vadd.f32 %v1073, 1.0
        %v1089 = vadd.f32 %v1075, 1.0
        %v1090 = vadd.f32 %v1077, 1.0
        %v1091 = vadd.f32 %v1079, 1.0
        %v1092 = vadd.f32 %v1081, 1.0
        %v1093 = vadd.f32 %v1083, 1.0
        %v1094 = vadd.f32 %v1085, 1.0
        %v1095 = vadd.f32 %v1087, 1.0
        %v1096 = vrcp.pop %v1088
        %v1097 = vmul.f32 %v1088, %v1096
        %v1098 = vsub.f32 1.0, %v1097
        %v1099 = vmul.f32 %v1096, %v1098
        %v1100 = vadd.f32 %v1096, %v1099
        %vm1101 = vweird.f32 %v1088
        %vm1102 = vweird.f32 %v1096
        %vm1103 = vmor %vm1101, %vm1102
        %v1104 = vsel %vm1103, %v1096, %v1100
        %v1105 = vand.u32 2147483647, %v1088
        %vm1106 = vcmp.eq.f32.partialorder %v1105, 8.507059e+37
        %v1107 = vand.u32 %v1088, 2147483648
        %v1108 = vor.u32 1.1754944e-38, %v1107
        %v1109 = vsel %vm1106, %v1108, %v1104
        %v1110 = vmul.f32 1.0, %v1109
        %v1111 = vrcp.pop %v1089
        %v1112 = vmul.f32 %v1089, %v1111
        %v1113 = vsub.f32 1.0, %v1112
        %v1114 = vmul.f32 %v1111, %v1113
        %v1115 = vadd.f32 %v1111, %v1114
        %vm1116 = vweird.f32 %v1089
        %vm1117 = vweird.f32 %v1111
        %vm1118 = vmor %vm1116, %vm1117
        %v1119 = vsel %vm1118, %v1111, %v1115
        %v1120 = vand.u32 2147483647, %v1089
        %vm1121 = vcmp.eq.f32.partialorder %v1120, 8.507059e+37
        %v1122 = vand.u32 %v1089, 2147483648
        %v1123 = vor.u32 1.1754944e-38, %v1122
        %v1124 = vsel %vm1121, %v1123, %v1119
        %v1125 = vmul.f32 1.0, %v1124
        %v1126 = vrcp.pop %v1090
        %v1127 = vmul.f32 %v1090, %v1126
        %v1128 = vsub.f32 1.0, %v1127
        %v1129 = vmul.f32 %v1126, %v1128
        %v1130 = vadd.f32 %v1126, %v1129
        %vm1131 = vweird.f32 %v1090
        %vm1132 = vweird.f32 %v1126
        %vm1133 = vmor %vm1131, %vm1132
        %v1134 = vsel %vm1133, %v1126, %v1130
        %v1135 = vand.u32 2147483647, %v1090
        %vm1136 = vcmp.eq.f32.partialorder %v1135, 8.507059e+37
        %v1137 = vand.u32 %v1090, 2147483648
        %v1138 = vor.u32 1.1754944e-38, %v1137
        %v1139 = vsel %vm1136, %v1138, %v1134
        %v1140 = vmul.f32 1.0, %v1139
        %v1141 = vrcp.pop %v1091
        %v1142 = vmul.f32 %v1091, %v1141
        %v1143 = vsub.f32 1.0, %v1142
        %v1144 = vmul.f32 %v1141, %v1143
        %v1145 = vadd.f32 %v1141, %v1144
        %vm1146 = vweird.f32 %v1091
        %vm1147 = vweird.f32 %v1141
        %vm1148 = vmor %vm1146, %vm1147
        %v1149 = vsel %vm1148, %v1141, %v1145
        %v1150 = vand.u32 2147483647, %v1091
        %vm1151 = vcmp.eq.f32.partialorder %v1150, 8.507059e+37
        %v1152 = vand.u32 %v1091, 2147483648
        %v1153 = vor.u32 1.1754944e-38, %v1152
        %v1154 = vsel %vm1151, %v1153, %v1149
        %v1155 = vmul.f32 1.0, %v1154
        %v1156 = vrcp.pop %v1092
        %v1157 = vmul.f32 %v1092, %v1156
        %v1158 = vsub.f32 1.0, %v1157
        %v1159 = vmul.f32 %v1156, %v1158
        %v1160 = vadd.f32 %v1156, %v1159
        %vm1161 = vweird.f32 %v1092
        %vm1162 = vweird.f32 %v1156
        %vm1163 = vmor %vm1161, %vm1162
        %v1164 = vsel %vm1163, %v1156, %v1160
        %v1165 = vand.u32 2147483647, %v1092
        %vm1166 = vcmp.eq.f32.partialorder %v1165, 8.507059e+37
        %v1167 = vand.u32 %v1092, 2147483648
        %v1168 = vor.u32 1.1754944e-38, %v1167
        %v1169 = vsel %vm1166, %v1168, %v1164
        %v1170 = vmul.f32 1.0, %v1169
        %v1171 = vrcp.pop %v1093
        %v1172 = vmul.f32 %v1093, %v1171
        %v1173 = vsub.f32 1.0, %v1172
        %v1174 = vmul.f32 %v1171, %v1173
        %v1175 = vadd.f32 %v1171, %v1174
        %vm1176 = vweird.f32 %v1093
        %vm1177 = vweird.f32 %v1171
        %vm1178 = vmor %vm1176, %vm1177
        %v1179 = vsel %vm1178, %v1171, %v1175
        %v1180 = vand.u32 2147483647, %v1093
        %vm1181 = vcmp.eq.f32.partialorder %v1180, 8.507059e+37
        %v1182 = vand.u32 %v1093, 2147483648
        %v1183 = vor.u32 1.1754944e-38, %v1182
        %v1184 = vsel %vm1181, %v1183, %v1179
        %v1185 = vmul.f32 1.0, %v1184
        %v1186 = vrcp.pop %v1094
        %v1187 = vmul.f32 %v1094, %v1186
        %v1188 = vsub.f32 1.0, %v1187
        %v1189 = vmul.f32 %v1186, %v1188
        %v1190 = vadd.f32 %v1186, %v1189
        %vm1191 = vweird.f32 %v1094
        %vm1192 = vweird.f32 %v1186
        %vm1193 = vmor %vm1191, %vm1192
        %v1194 = vsel %vm1193, %v1186, %v1190
        %v1195 = vand.u32 2147483647, %v1094
        %vm1196 = vcmp.eq.f32.partialorder %v1195, 8.507059e+37
        %v1197 = vand.u32 %v1094, 2147483648
        %v1198 = vor.u32 1.1754944e-38, %v1197
        %v1199 = vsel %vm1196, %v1198, %v1194
        %v1200 = vmul.f32 1.0, %v1199
        %v1201 = vrcp.pop %v1095
        %v1202 = vmul.f32 %v1095, %v1201
        %v1203 = vsub.f32 1.0, %v1202
        %v1204 = vmul.f32 %v1201, %v1203
        %v1205 = vadd.f32 %v1201, %v1204
        %vm1206 = vweird.f32 %v1095
        %vm1207 = vweird.f32 %v1201
        %vm1208 = vmor %vm1206, %vm1207
        %v1209 = vsel %vm1208, %v1201, %v1205
        %v1210 = vand.u32 2147483647, %v1095
        %vm1211 = vcmp.eq.f32.partialorder %v1210, 8.507059e+37
        %v1212 = vand.u32 %v1095, 2147483648
        %v1213 = vor.u32 1.1754944e-38, %v1212
        %v1214 = vsel %vm1211, %v1213, %v1209
        %v1215 = vmul.f32 1.0, %v1214
        %v1216 = vmul.f32 %v1056, %v1110
        %v1217 = vmul.f32 %v1057, %v1125
        %v1218 = vmul.f32 %v1058, %v1140
        %v1219 = vmul.f32 %v1059, %v1155
        %v1220 = vmul.f32 %v1060, %v1170
        %v1221 = vmul.f32 %v1061, %v1185
        %v1222 = vmul.f32 %v1062, %v1200
        %v1223 = vmul.f32 %v1063, %v1215
        %1224 = vst.msk [vmem:[%s240] sm:$0xff] %vm1031, %v1216
        %1225 = vst.msk [vmem:[%s240 + $0x8] sm:$0xff] %vm1031, %v1217
        %1226 = vst.msk [vmem:[%s240 + $0x10] sm:$0xff] %vm1031, %v1218
        %1227 = vst.msk [vmem:[%s240 + $0x18] sm:$0xff] %vm1031, %v1219
        %1228 = vst.msk [vmem:[%s240 + $0x20] sm:$0xff] %vm1031, %v1220
        %1229 = vst.msk [vmem:[%s240 + $0x28] sm:$0xff] %vm1031, %v1221
        %1230 = vst.msk [vmem:[%s240 + $0x30] sm:$0xff] %vm1031, %v1222
        %1231 = vst.msk [vmem:[%s240 + $0x38] sm:$0xff] %vm1031, %v1223
      $region40: #{tpu_custom_call.1} parent=31 // pred_fallthru
        _
      %p1232 = scmp.lt.s32.totalorder %s19, 1
      %s1233 = scalar_select %p1232, %s19, 1
      %p1234 = scmp.lt.s32.totalorder %s20, 7
      %s1235 = scalar_select %p1234, %s20, 7
      %s1236 = smul.addr %s1235, 8
      %s1237 = smul.addr %s1233, 64
      %s1238 = sadd.s32 %s1236, %s1237
      %s1239 = smul.addr %s1238, 8
      %s1240 = scalar_lea.vmem %s3, %s1239
      // Predicated region
      $region41: #{tpu_custom_call.1} parent=31 // pred_check
        %p1241 = pneg %p130
      $region42: #{tpu_custom_call.1} parent=31 // pred_check_branch
        %1243 = sbr.rel (%p1241) target = $region44
      $region43: #{tpu_custom_call.1} parent=31 // pred_region
        _
      $region44: #{tpu_custom_call.1} parent=31 // pred_fallthru
        _
    $region32: #{tpu_custom_call.1} parent=5 // pred_fallthru
      _
    %p1244 = scmp.le.s32.totalorder 2, %s9
    // Predicated region
    $region45: #{tpu_custom_call.1} parent=5 // pred_check
      %p1245 = pneg %p1244
    $region46: #{tpu_custom_call.1} parent=5 // pred_check_branch
      %1247 = sbr.rel (%p1245) target = $region48
    $region47: #{tpu_custom_call.1} parent=5 // pred_region
      %s1248 = ssub.s32 %s9, 2
      // Predicated region
      $region49: #{tpu_custom_call.1} parent=47 // pred_check
        %p1249 = pneg %p136
      $region50: #{tpu_custom_call.1} parent=47 // pred_check_branch
        %1251 = sbr.rel (%p1249) target = $region52
      $region51: #{tpu_custom_call.1} parent=47 // pred_region
        %p1252 = scmp.lt.s32.totalorder %s22, 1
        %s1253 = scalar_select %p1252, %s22, 1
        %p1254 = scmp.lt.s32.totalorder %s23, 7
        %s1255 = scalar_select %p1254, %s23, 7
        %s1256 = smul.addr %s1255, 8
        %s1257 = smul.addr %s1253, 64
        %s1258 = sadd.s32 %s1256, %s1257
        %s1259 = smul.addr %s1258, 8
        %s1260 = scalar_lea.vmem %s3, %s1259
      $region52: #{tpu_custom_call.1} parent=47 // pred_fallthru
        _
    $region48: #{tpu_custom_call.1} parent=5 // pred_fallthru
      _
  $region6: #{tpu_custom_call.1} parent=0 // loop_footer
    %s13 = sadd.s32 1, %s9
  $region7: #{tpu_custom_call.1} parent=0 // loop_footer_branch
    %8 = sbr.rel target = $region3
  $region8: #{tpu_custom_call.1} parent=0 // loop_exit
    _

</llo_original>
